<compile_context>
chip_gen: v7x
topology: tpu7x:2x2x1
jax: 0.10.0
libtpu: 0.0.40
codegen_flags: <defaults>
</compile_context>

<pallas_src>
import numpy as np
import jax
import jax.numpy as jnp
from jax.experimental import pallas as pl
from jax.experimental.pallas import tpu as pltpu


def get_permutation(n_features, p=0.25, seed=0):
    """Deterministic NumPy port of torch get_permutation. Returns (perm, A)."""
    # TODO(synk): torch draws fresh randomness per forward; here the RNG is a
    # deterministic host-side NumPy draw (kernel semantics are unchanged).
    rng = np.random.default_rng(seed)
    shuffle = rng.random(n_features) < p
    idc = np.arange(n_features)
    sel_perm = rng.permutation(int(shuffle.sum()))
    idc_shuffle = idc[shuffle][sel_perm]
    perm = np.arange(n_features)
    perm[shuffle] = idc_shuffle
    A = np.eye(n_features, dtype=np.float32)[perm, :]
    return perm.astype(np.int32), A


def _spatial_layout(HW):
    """View the per-channel spatial extent as (n_sub sublanes, lane_w lanes)."""
    if HW % 128 == 0:
        return HW // 128, 128
    # TODO(synk): ragged HW (not a multiple of 128) falls back to a single
    # masked-lane block; a lane-padded view would trade a little write
    # amplification for unmasked stores.
    return 1, HW


def _min_sublanes(itemsize):
    # Native sublane packing: 8 for 32-bit, 16 for 16-bit, 32 for 8-bit dtypes.
    return {4: 8, 2: 16, 1: 32}.get(int(itemsize), 8)


# ----------------------------------------------------------------------------
# Path A: BlockSpec gather (per-channel row, large lane-dense spatial blocks).
# ----------------------------------------------------------------------------
def _gather_copy_kernel(src_ref, x_ref, o_ref):
    # src_ref (SMEM scalar prefetch) is consumed by the index_maps only; the
    # body is a pure block copy -- the channel permutation happens in the DMA.
    del src_ref
    o_ref[...] = x_ref[...]


def _feature_rotation_blockspec(x3, src_rows, *, itemsize, block_bytes):
    NC, n_sub, lane_w = x3.shape
    min_sub = _min_sublanes(itemsize)
    max_sublanes = max(min_sub, block_bytes // (lane_w * itemsize))
    # s_sub must be a multiple of the dtype-native sublane count OR the full
    # extent of n_sub (full extent is always a legal block shape).
    candidates = [d for d in range(min(max_sublanes, n_sub), 0, -1)
                  if n_sub % d == 0 and d % min_sub == 0]
    s_sub = candidates[0] if candidates else n_sub

    return pl.pallas_call(
        _gather_copy_kernel,
        out_shape=jax.ShapeDtypeStruct((NC, n_sub, lane_w), x3.dtype),
        grid_spec=pltpu.PrefetchScalarGridSpec(
            num_scalar_prefetch=1,
            grid=(NC, n_sub // s_sub),
            in_specs=[
                # Data-dependent channel gather via scalar prefetch; 3-deep
                # buffering hides the jitter of permuted-row DMAs.
                pl.BlockSpec((1, s_sub, lane_w),
                             lambda r, t, src: (src[r], t, 0),
                             pipeline_mode=pl.Buffered(3)),
            ],
            out_specs=pl.BlockSpec((1, s_sub, lane_w),
                                   lambda r, t, src: (r, t, 0)),
        ),
        compiler_params=pltpu.CompilerParams(
            # Row axis first: on megacore each TC gets a contiguous half of
            # the (n, channel) range, keeping its DMA stream mostly sequential.
            dimension_semantics=("parallel", "parallel"),
            vmem_limit_bytes=32 * 1024 * 1024,
        ),
        cost_estimate=pl.CostEstimate(
            flops=0, transcendentals=0,
            bytes_accessed=2 * NC * n_sub * lane_w * itemsize),
    )(src_rows, x3)


# ----------------------------------------------------------------------------
# Path B: batched manual-DMA gather (G small channel rows per grid step).
# ----------------------------------------------------------------------------
def _make_dma_gather_kernel(G):
    def kernel(src_ref, x_hbm, o_ref, buf, sems):
        base = pl.program_id(0) * G
        copies = []
        for g in range(G):          # static unroll: G concurrent row DMAs
            cp = pltpu.make_async_copy(x_hbm.at[src_ref[base + g]],
                                       buf.at[g], sems.at[g])
            cp.start()
            copies.append(cp)
        for cp in copies:
            cp.wait()
        o_ref[...] = buf[...]       # one lane-dense block store
    return kernel


def _feature_rotation_dma(x3, src_rows, *, itemsize, block_bytes, max_group=64):
    NC, n_sub, lane_w = x3.shape
    row_bytes = n_sub * lane_w * itemsize
    g_target = max(1, min(max_group, block_bytes // row_bytes, NC))
    # Keep G a divisor of NC so every grid step writes a full output block.
    # TODO(synk): a prime NC degrades to G=1; a masked tail block would fix it.
    G = next(d for d in range(g_target, 0, -1) if NC % d == 0)
    num_steps = NC // G

    return pl.pallas_call(
        _make_dma_gather_kernel(G),
        out_shape=jax.ShapeDtypeStruct((NC, n_sub, lane_w), x3.dtype),
        grid_spec=pltpu.PrefetchScalarGridSpec(
            num_scalar_prefetch=1,
            grid=(num_steps,),
            in_specs=[pl.BlockSpec(memory_space=pl.ANY)],   # raw HBM ref
            out_specs=pl.BlockSpec((G, n_sub, lane_w),
                                   lambda r, src: (r, 0, 0)),
            scratch_shapes=[
                pltpu.VMEM((G, n_sub, lane_w), x3.dtype),
                pltpu.SemaphoreType.DMA((G,)),
            ],
        ),
        compiler_params=pltpu.CompilerParams(
            dimension_semantics=("parallel",),
            vmem_limit_bytes=32 * 1024 * 1024,
        ),
        cost_estimate=pl.CostEstimate(
            flops=0, transcendentals=0,
            bytes_accessed=2 * NC * n_sub * lane_w * itemsize),
    )(src_rows, x3)


# ----------------------------------------------------------------------------
# Public wrapper.
# ----------------------------------------------------------------------------
def feature_rotation(x_nchw, perm, *, block_bytes=2 * 1024 * 1024,
                     small_row_bytes=128 * 1024):
    """out[n, j] = x[n, inv_perm[j]]  ==  einsum('ij,nipq->njpq', eye(C)[perm], x).

    Only valid when W = eye(C)[perm] is a pure permutation (training mode of
    FeatureRotation); eval mode is the identity and never calls this.
    """
    N, C, H, W = x_nchw.shape
    HW = H * W
    itemsize = int(np.dtype(x_nchw.dtype).itemsize)
    n_sub, lane_w = _spatial_layout(HW)

    # Host-side index math (perm is host NumPy): inverse permutation and the
    # flattened source-row table -- output row n*C + j reads row n*C + inv_perm[j].
    inv_perm = np.argsort(np.asarray(perm)).astype(np.int32)
    src_rows_np = (np.arange(N, dtype=np.int32)[:, None] * np.int32(C)
                   + inv_perm[None, :]).reshape(-1)
    src_rows = jnp.asarray(src_rows_np)

    x3 = x_nchw.reshape(N * C, n_sub, lane_w)  # free reshape (NCHW contiguous)

    row_bytes = HW * itemsize
    if row_bytes >= small_row_bytes:
        out3 = _feature_rotation_blockspec(x3, src_rows, itemsize=itemsize,
                                           block_bytes=block_bytes)
    else:
        out3 = _feature_rotation_dma(x3, src_rows, itemsize=itemsize,
                                     block_bytes=block_bytes)
    return out3.reshape(N, C, H, W)


if __name__ == "__main__":
    n_features = 4
    key = jax.random.PRNGKey(0)
    x = jax.random.normal(key, (2, n_features, 16, 16), dtype=jnp.float32)

    # Training-mode forward: deterministic permutation (and its matrix for the
    # reference check).
    perm, W_np = get_permutation(n_features, p=0.25, seed=0)
    ref = jnp.einsum("ij,nipq->njpq", jnp.asarray(W_np), x)

    # Path B (small per-channel rows -> batched manual-DMA gather).
    out_dma = jax.block_until_ready(feature_rotation(x, perm))
    np.testing.assert_allclose(np.asarray(out_dma), np.asarray(ref),
                               rtol=1e-6, atol=1e-6)

    # Path A (BlockSpec gather) forced on the same input for coverage.
    out_bs = jax.block_until_ready(feature_rotation(x, perm, small_row_bytes=0))
    np.testing.assert_allclose(np.asarray(out_bs), np.asarray(ref),
                               rtol=1e-6, atol=1e-6)

    print("KERNEL_OK")
</pallas_src>

<mosaic_0001>
module attributes {stable_mosaic.version = 11 : i64} {
  func.func @kernel(%arg0: i32, %arg1: memref<8xi32, #tpu.memory_space<smem>>, %arg2: memref<8x2x128xf32, #tpu.memory_space<any>>, %arg3: memref<8x2x128xf32, #tpu.memory_space<vmem>>, %arg4: memref<8x2x128xf32, #tpu.memory_space<vmem>>, %arg5: memref<8x!tpu.dma_semaphore, #tpu.memory_space<semaphore_mem>>) attributes {dimension_semantics = [#tpu.dimension_semantics<parallel>], iteration_bounds = array<i64: 1>, scalar_prefetch = 1 : i64, scratch_operands = 2 : i64, tpu.core_type = #tpu.core_type<tc>, window_params = [{}, {transform_indices = @transform_1, window_bounds = array<i64: 8, 2, 128>}]} {
    %c8_i32 = arith.constant 8 : i32
    %0 = arith.muli %arg0, %c8_i32 : i32
    %c0_i32 = arith.constant 0 : i32
    %1 = arith.addi %0, %c0_i32 : i32
    %2 = arith.index_cast %1 : i32 to index
    %3 = memref.load %arg1[%2] : memref<8xi32, #tpu.memory_space<smem>>
    %c0_i32_0 = arith.constant 0 : i32
    %c0_i32_1 = arith.constant 0 : i32
    %c0_i32_2 = arith.constant 0 : i32
    %c0_i32_3 = arith.constant 0 : i32
    %4 = tpu.memref_slice %arg2[%3, %c0_i32_2, %c0_i32_3] : memref<8x2x128xf32, #tpu.memory_space<any>> -> memref<1x2x128xf32, #tpu.memory_space<any>>
    %5 = tpu.memref_squeeze %4 : memref<1x2x128xf32, #tpu.memory_space<any>> -> memref<2x128xf32, #tpu.memory_space<any>>
    %c0_i32_4 = arith.constant 0 : i32
    %c0_i32_5 = arith.constant 0 : i32
    %6 = tpu.memref_slice %arg4[%c0_i32_0, %c0_i32_4, %c0_i32_5] : memref<8x2x128xf32, #tpu.memory_space<vmem>> -> memref<1x2x128xf32, #tpu.memory_space<vmem>>
    %7 = tpu.memref_squeeze %6 : memref<1x2x128xf32, #tpu.memory_space<vmem>> -> memref<2x128xf32, #tpu.memory_space<vmem>>
    %8 = tpu.memref_slice %arg5[%c0_i32_1] : memref<8x!tpu.dma_semaphore, #tpu.memory_space<semaphore_mem>> -> memref<1x!tpu.dma_semaphore, #tpu.memory_space<semaphore_mem>>
    %9 = tpu.memref_squeeze %8 : memref<1x!tpu.dma_semaphore, #tpu.memory_space<semaphore_mem>> -> memref<!tpu.dma_semaphore, #tpu.memory_space<semaphore_mem>>
    tpu.enqueue_dma source(%5 : memref<2x128xf32, #tpu.memory_space<any>>) target(%7 : memref<2x128xf32, #tpu.memory_space<vmem>>) target_semaphore(%9 : memref<!tpu.dma_semaphore, #tpu.memory_space<semaphore_mem>>)
    %c1_i32 = arith.constant 1 : i32
    %10 = arith.addi %0, %c1_i32 : i32
    %11 = arith.index_cast %10 : i32 to index
    %12 = memref.load %arg1[%11] : memref<8xi32, #tpu.memory_space<smem>>
    %c1_i32_6 = arith.constant 1 : i32
    %c1_i32_7 = arith.constant 1 : i32
    %c0_i32_8 = arith.constant 0 : i32
    %c0_i32_9 = arith.constant 0 : i32
    %13 = tpu.memref_slice %arg2[%12, %c0_i32_8, %c0_i32_9] : memref<8x2x128xf32, #tpu.memory_space<any>> -> memref<1x2x128xf32, #tpu.memory_space<any>>
    %14 = tpu.memref_squeeze %13 : memref<1x2x128xf32, #tpu.memory_space<any>> -> memref<2x128xf32, #tpu.memory_space<any>>
    %c0_i32_10 = arith.constant 0 : i32
    %c0_i32_11 = arith.constant 0 : i32
    %15 = tpu.memref_slice %arg4[%c1_i32_6, %c0_i32_10, %c0_i32_11] : memref<8x2x128xf32, #tpu.memory_space<vmem>> -> memref<1x2x128xf32, #tpu.memory_space<vmem>>
    %16 = tpu.memref_squeeze %15 : memref<1x2x128xf32, #tpu.memory_space<vmem>> -> memref<2x128xf32, #tpu.memory_space<vmem>>
    %17 = tpu.memref_slice %arg5[%c1_i32_7] : memref<8x!tpu.dma_semaphore, #tpu.memory_space<semaphore_mem>> -> memref<1x!tpu.dma_semaphore, #tpu.memory_space<semaphore_mem>>
    %18 = tpu.memref_squeeze %17 : memref<1x!tpu.dma_semaphore, #tpu.memory_space<semaphore_mem>> -> memref<!tpu.dma_semaphore, #tpu.memory_space<semaphore_mem>>
    tpu.enqueue_dma source(%14 : memref<2x128xf32, #tpu.memory_space<any>>) target(%16 : memref<2x128xf32, #tpu.memory_space<vmem>>) target_semaphore(%18 : memref<!tpu.dma_semaphore, #tpu.memory_space<semaphore_mem>>)
    %c2_i32 = arith.constant 2 : i32
    %19 = arith.addi %0, %c2_i32 : i32
    %20 = arith.index_cast %19 : i32 to index
    %21 = memref.load %arg1[%20] : memref<8xi32, #tpu.memory_space<smem>>
    %c2_i32_12 = arith.constant 2 : i32
    %c2_i32_13 = arith.constant 2 : i32
    %c0_i32_14 = arith.constant 0 : i32
    %c0_i32_15 = arith.constant 0 : i32
    %22 = tpu.memref_slice %arg2[%21, %c0_i32_14, %c0_i32_15] : memref<8x2x128xf32, #tpu.memory_space<any>> -> memref<1x2x128xf32, #tpu.memory_space<any>>
    %23 = tpu.memref_squeeze %22 : memref<1x2x128xf32, #tpu.memory_space<any>> -> memref<2x128xf32, #tpu.memory_space<any>>
    %c0_i32_16 = arith.constant 0 : i32
    %c0_i32_17 = arith.constant 0 : i32
    %24 = tpu.memref_slice %arg4[%c2_i32_12, %c0_i32_16, %c0_i32_17] : memref<8x2x128xf32, #tpu.memory_space<vmem>> -> memref<1x2x128xf32, #tpu.memory_space<vmem>>
    %25 = tpu.memref_squeeze %24 : memref<1x2x128xf32, #tpu.memory_space<vmem>> -> memref<2x128xf32, #tpu.memory_space<vmem>>
    %26 = tpu.memref_slice %arg5[%c2_i32_13] : memref<8x!tpu.dma_semaphore, #tpu.memory_space<semaphore_mem>> -> memref<1x!tpu.dma_semaphore, #tpu.memory_space<semaphore_mem>>
    %27 = tpu.memref_squeeze %26 : memref<1x!tpu.dma_semaphore, #tpu.memory_space<semaphore_mem>> -> memref<!tpu.dma_semaphore, #tpu.memory_space<semaphore_mem>>
    tpu.enqueue_dma source(%23 : memref<2x128xf32, #tpu.memory_space<any>>) target(%25 : memref<2x128xf32, #tpu.memory_space<vmem>>) target_semaphore(%27 : memref<!tpu.dma_semaphore, #tpu.memory_space<semaphore_mem>>)
    %c3_i32 = arith.constant 3 : i32
    %28 = arith.addi %0, %c3_i32 : i32
    %29 = arith.index_cast %28 : i32 to index
    %30 = memref.load %arg1[%29] : memref<8xi32, #tpu.memory_space<smem>>
    %c3_i32_18 = arith.constant 3 : i32
    %c3_i32_19 = arith.constant 3 : i32
    %c0_i32_20 = arith.constant 0 : i32
    %c0_i32_21 = arith.constant 0 : i32
    %31 = tpu.memref_slice %arg2[%30, %c0_i32_20, %c0_i32_21] : memref<8x2x128xf32, #tpu.memory_space<any>> -> memref<1x2x128xf32, #tpu.memory_space<any>>
    %32 = tpu.memref_squeeze %31 : memref<1x2x128xf32, #tpu.memory_space<any>> -> memref<2x128xf32, #tpu.memory_space<any>>
    %c0_i32_22 = arith.constant 0 : i32
    %c0_i32_23 = arith.constant 0 : i32
    %33 = tpu.memref_slice %arg4[%c3_i32_18, %c0_i32_22, %c0_i32_23] : memref<8x2x128xf32, #tpu.memory_space<vmem>> -> memref<1x2x128xf32, #tpu.memory_space<vmem>>
    %34 = tpu.memref_squeeze %33 : memref<1x2x128xf32, #tpu.memory_space<vmem>> -> memref<2x128xf32, #tpu.memory_space<vmem>>
    %35 = tpu.memref_slice %arg5[%c3_i32_19] : memref<8x!tpu.dma_semaphore, #tpu.memory_space<semaphore_mem>> -> memref<1x!tpu.dma_semaphore, #tpu.memory_space<semaphore_mem>>
    %36 = tpu.memref_squeeze %35 : memref<1x!tpu.dma_semaphore, #tpu.memory_space<semaphore_mem>> -> memref<!tpu.dma_semaphore, #tpu.memory_space<semaphore_mem>>
    tpu.enqueue_dma source(%32 : memref<2x128xf32, #tpu.memory_space<any>>) target(%34 : memref<2x128xf32, #tpu.memory_space<vmem>>) target_semaphore(%36 : memref<!tpu.dma_semaphore, #tpu.memory_space<semaphore_mem>>)
    %c4_i32 = arith.constant 4 : i32
    %37 = arith.addi %0, %c4_i32 : i32
    %38 = arith.index_cast %37 : i32 to index
    %39 = memref.load %arg1[%38] : memref<8xi32, #tpu.memory_space<smem>>
    %c4_i32_24 = arith.constant 4 : i32
    %c4_i32_25 = arith.constant 4 : i32
    %c0_i32_26 = arith.constant 0 : i32
    %c0_i32_27 = arith.constant 0 : i32
    %40 = tpu.memref_slice %arg2[%39, %c0_i32_26, %c0_i32_27] : memref<8x2x128xf32, #tpu.memory_space<any>> -> memref<1x2x128xf32, #tpu.memory_space<any>>
    %41 = tpu.memref_squeeze %40 : memref<1x2x128xf32, #tpu.memory_space<any>> -> memref<2x128xf32, #tpu.memory_space<any>>
    %c0_i32_28 = arith.constant 0 : i32
    %c0_i32_29 = arith.constant 0 : i32
    %42 = tpu.memref_slice %arg4[%c4_i32_24, %c0_i32_28, %c0_i32_29] : memref<8x2x128xf32, #tpu.memory_space<vmem>> -> memref<1x2x128xf32, #tpu.memory_space<vmem>>
    %43 = tpu.memref_squeeze %42 : memref<1x2x128xf32, #tpu.memory_space<vmem>> -> memref<2x128xf32, #tpu.memory_space<vmem>>
    %44 = tpu.memref_slice %arg5[%c4_i32_25] : memref<8x!tpu.dma_semaphore, #tpu.memory_space<semaphore_mem>> -> memref<1x!tpu.dma_semaphore, #tpu.memory_space<semaphore_mem>>
    %45 = tpu.memref_squeeze %44 : memref<1x!tpu.dma_semaphore, #tpu.memory_space<semaphore_mem>> -> memref<!tpu.dma_semaphore, #tpu.memory_space<semaphore_mem>>
    tpu.enqueue_dma source(%41 : memref<2x128xf32, #tpu.memory_space<any>>) target(%43 : memref<2x128xf32, #tpu.memory_space<vmem>>) target_semaphore(%45 : memref<!tpu.dma_semaphore, #tpu.memory_space<semaphore_mem>>)
    %c5_i32 = arith.constant 5 : i32
    %46 = arith.addi %0, %c5_i32 : i32
    %47 = arith.index_cast %46 : i32 to index
    %48 = memref.load %arg1[%47] : memref<8xi32, #tpu.memory_space<smem>>
    %c5_i32_30 = arith.constant 5 : i32
    %c5_i32_31 = arith.constant 5 : i32
    %c0_i32_32 = arith.constant 0 : i32
    %c0_i32_33 = arith.constant 0 : i32
    %49 = tpu.memref_slice %arg2[%48, %c0_i32_32, %c0_i32_33] : memref<8x2x128xf32, #tpu.memory_space<any>> -> memref<1x2x128xf32, #tpu.memory_space<any>>
    %50 = tpu.memref_squeeze %49 : memref<1x2x128xf32, #tpu.memory_space<any>> -> memref<2x128xf32, #tpu.memory_space<any>>
    %c0_i32_34 = arith.constant 0 : i32
    %c0_i32_35 = arith.constant 0 : i32
    %51 = tpu.memref_slice %arg4[%c5_i32_30, %c0_i32_34, %c0_i32_35] : memref<8x2x128xf32, #tpu.memory_space<vmem>> -> memref<1x2x128xf32, #tpu.memory_space<vmem>>
    %52 = tpu.memref_squeeze %51 : memref<1x2x128xf32, #tpu.memory_space<vmem>> -> memref<2x128xf32, #tpu.memory_space<vmem>>
    %53 = tpu.memref_slice %arg5[%c5_i32_31] : memref<8x!tpu.dma_semaphore, #tpu.memory_space<semaphore_mem>> -> memref<1x!tpu.dma_semaphore, #tpu.memory_space<semaphore_mem>>
    %54 = tpu.memref_squeeze %53 : memref<1x!tpu.dma_semaphore, #tpu.memory_space<semaphore_mem>> -> memref<!tpu.dma_semaphore, #tpu.memory_space<semaphore_mem>>
    tpu.enqueue_dma source(%50 : memref<2x128xf32, #tpu.memory_space<any>>) target(%52 : memref<2x128xf32, #tpu.memory_space<vmem>>) target_semaphore(%54 : memref<!tpu.dma_semaphore, #tpu.memory_space<semaphore_mem>>)
    %c6_i32 = arith.constant 6 : i32
    %55 = arith.addi %0, %c6_i32 : i32
    %56 = arith.index_cast %55 : i32 to index
    %57 = memref.load %arg1[%56] : memref<8xi32, #tpu.memory_space<smem>>
    %c6_i32_36 = arith.constant 6 : i32
    %c6_i32_37 = arith.constant 6 : i32
    %c0_i32_38 = arith.constant 0 : i32
    %c0_i32_39 = arith.constant 0 : i32
    %58 = tpu.memref_slice %arg2[%57, %c0_i32_38, %c0_i32_39] : memref<8x2x128xf32, #tpu.memory_space<any>> -> memref<1x2x128xf32, #tpu.memory_space<any>>
    %59 = tpu.memref_squeeze %58 : memref<1x2x128xf32, #tpu.memory_space<any>> -> memref<2x128xf32, #tpu.memory_space<any>>
    %c0_i32_40 = arith.constant 0 : i32
    %c0_i32_41 = arith.constant 0 : i32
    %60 = tpu.memref_slice %arg4[%c6_i32_36, %c0_i32_40, %c0_i32_41] : memref<8x2x128xf32, #tpu.memory_space<vmem>> -> memref<1x2x128xf32, #tpu.memory_space<vmem>>
    %61 = tpu.memref_squeeze %60 : memref<1x2x128xf32, #tpu.memory_space<vmem>> -> memref<2x128xf32, #tpu.memory_space<vmem>>
    %62 = tpu.memref_slice %arg5[%c6_i32_37] : memref<8x!tpu.dma_semaphore, #tpu.memory_space<semaphore_mem>> -> memref<1x!tpu.dma_semaphore, #tpu.memory_space<semaphore_mem>>
    %63 = tpu.memref_squeeze %62 : memref<1x!tpu.dma_semaphore, #tpu.memory_space<semaphore_mem>> -> memref<!tpu.dma_semaphore, #tpu.memory_space<semaphore_mem>>
    tpu.enqueue_dma source(%59 : memref<2x128xf32, #tpu.memory_space<any>>) target(%61 : memref<2x128xf32, #tpu.memory_space<vmem>>) target_semaphore(%63 : memref<!tpu.dma_semaphore, #tpu.memory_space<semaphore_mem>>)
    %c7_i32 = arith.constant 7 : i32
    %64 = arith.addi %0, %c7_i32 : i32
    %65 = arith.index_cast %64 : i32 to index
    %66 = memref.load %arg1[%65] : memref<8xi32, #tpu.memory_space<smem>>
    %c7_i32_42 = arith.constant 7 : i32
    %c7_i32_43 = arith.constant 7 : i32
    %c0_i32_44 = arith.constant 0 : i32
    %c0_i32_45 = arith.constant 0 : i32
    %67 = tpu.memref_slice %arg2[%66, %c0_i32_44, %c0_i32_45] : memref<8x2x128xf32, #tpu.memory_space<any>> -> memref<1x2x128xf32, #tpu.memory_space<any>>
    %68 = tpu.memref_squeeze %67 : memref<1x2x128xf32, #tpu.memory_space<any>> -> memref<2x128xf32, #tpu.memory_space<any>>
    %c0_i32_46 = arith.constant 0 : i32
    %c0_i32_47 = arith.constant 0 : i32
    %69 = tpu.memref_slice %arg4[%c7_i32_42, %c0_i32_46, %c0_i32_47] : memref<8x2x128xf32, #tpu.memory_space<vmem>> -> memref<1x2x128xf32, #tpu.memory_space<vmem>>
    %70 = tpu.memref_squeeze %69 : memref<1x2x128xf32, #tpu.memory_space<vmem>> -> memref<2x128xf32, #tpu.memory_space<vmem>>
    %71 = tpu.memref_slice %arg5[%c7_i32_43] : memref<8x!tpu.dma_semaphore, #tpu.memory_space<semaphore_mem>> -> memref<1x!tpu.dma_semaphore, #tpu.memory_space<semaphore_mem>>
    %72 = tpu.memref_squeeze %71 : memref<1x!tpu.dma_semaphore, #tpu.memory_space<semaphore_mem>> -> memref<!tpu.dma_semaphore, #tpu.memory_space<semaphore_mem>>
    tpu.enqueue_dma source(%68 : memref<2x128xf32, #tpu.memory_space<any>>) target(%70 : memref<2x128xf32, #tpu.memory_space<vmem>>) target_semaphore(%72 : memref<!tpu.dma_semaphore, #tpu.memory_space<semaphore_mem>>)
    %c0_i32_48 = arith.constant 0 : i32
    %c0_i32_49 = arith.constant 0 : i32
    %c0_i32_50 = arith.constant 0 : i32
    %c0_i32_51 = arith.constant 0 : i32
    %73 = tpu.memref_slice %arg2[%3, %c0_i32_50, %c0_i32_51] : memref<8x2x128xf32, #tpu.memory_space<any>> -> memref<1x2x128xf32, #tpu.memory_space<any>>
    %74 = tpu.memref_squeeze %73 : memref<1x2x128xf32, #tpu.memory_space<any>> -> memref<2x128xf32, #tpu.memory_space<any>>
    %c0_i32_52 = arith.constant 0 : i32
    %c0_i32_53 = arith.constant 0 : i32
    %75 = tpu.memref_slice %arg4[%c0_i32_48, %c0_i32_52, %c0_i32_53] : memref<8x2x128xf32, #tpu.memory_space<vmem>> -> memref<1x2x128xf32, #tpu.memory_space<vmem>>
    %76 = tpu.memref_squeeze %75 : memref<1x2x128xf32, #tpu.memory_space<vmem>> -> memref<2x128xf32, #tpu.memory_space<vmem>>
    %77 = tpu.memref_slice %arg5[%c0_i32_49] : memref<8x!tpu.dma_semaphore, #tpu.memory_space<semaphore_mem>> -> memref<1x!tpu.dma_semaphore, #tpu.memory_space<semaphore_mem>>
    %78 = tpu.memref_squeeze %77 : memref<1x!tpu.dma_semaphore, #tpu.memory_space<semaphore_mem>> -> memref<!tpu.dma_semaphore, #tpu.memory_space<semaphore_mem>>
    tpu.wait_dma2 semaphore(%78 : memref<!tpu.dma_semaphore, #tpu.memory_space<semaphore_mem>>) src(%74 : memref<2x128xf32, #tpu.memory_space<any>>) dst(%76 : memref<2x128xf32, #tpu.memory_space<vmem>>)
    %c1_i32_54 = arith.constant 1 : i32
    %c1_i32_55 = arith.constant 1 : i32
    %c0_i32_56 = arith.constant 0 : i32
    %c0_i32_57 = arith.constant 0 : i32
    %79 = tpu.memref_slice %arg2[%12, %c0_i32_56, %c0_i32_57] : memref<8x2x128xf32, #tpu.memory_space<any>> -> memref<1x2x128xf32, #tpu.memory_space<any>>
    %80 = tpu.memref_squeeze %79 : memref<1x2x128xf32, #tpu.memory_space<any>> -> memref<2x128xf32, #tpu.memory_space<any>>
    %c0_i32_58 = arith.constant 0 : i32
    %c0_i32_59 = arith.constant 0 : i32
    %81 = tpu.memref_slice %arg4[%c1_i32_54, %c0_i32_58, %c0_i32_59] : memref<8x2x128xf32, #tpu.memory_space<vmem>> -> memref<1x2x128xf32, #tpu.memory_space<vmem>>
    %82 = tpu.memref_squeeze %81 : memref<1x2x128xf32, #tpu.memory_space<vmem>> -> memref<2x128xf32, #tpu.memory_space<vmem>>
    %83 = tpu.memref_slice %arg5[%c1_i32_55] : memref<8x!tpu.dma_semaphore, #tpu.memory_space<semaphore_mem>> -> memref<1x!tpu.dma_semaphore, #tpu.memory_space<semaphore_mem>>
    %84 = tpu.memref_squeeze %83 : memref<1x!tpu.dma_semaphore, #tpu.memory_space<semaphore_mem>> -> memref<!tpu.dma_semaphore, #tpu.memory_space<semaphore_mem>>
    tpu.wait_dma2 semaphore(%84 : memref<!tpu.dma_semaphore, #tpu.memory_space<semaphore_mem>>) src(%80 : memref<2x128xf32, #tpu.memory_space<any>>) dst(%82 : memref<2x128xf32, #tpu.memory_space<vmem>>)
    %c2_i32_60 = arith.constant 2 : i32
    %c2_i32_61 = arith.constant 2 : i32
    %c0_i32_62 = arith.constant 0 : i32
    %c0_i32_63 = arith.constant 0 : i32
    %85 = tpu.memref_slice %arg2[%21, %c0_i32_62, %c0_i32_63] : memref<8x2x128xf32, #tpu.memory_space<any>> -> memref<1x2x128xf32, #tpu.memory_space<any>>
    %86 = tpu.memref_squeeze %85 : memref<1x2x128xf32, #tpu.memory_space<any>> -> memref<2x128xf32, #tpu.memory_space<any>>
    %c0_i32_64 = arith.constant 0 : i32
    %c0_i32_65 = arith.constant 0 : i32
    %87 = tpu.memref_slice %arg4[%c2_i32_60, %c0_i32_64, %c0_i32_65] : memref<8x2x128xf32, #tpu.memory_space<vmem>> -> memref<1x2x128xf32, #tpu.memory_space<vmem>>
    %88 = tpu.memref_squeeze %87 : memref<1x2x128xf32, #tpu.memory_space<vmem>> -> memref<2x128xf32, #tpu.memory_space<vmem>>
    %89 = tpu.memref_slice %arg5[%c2_i32_61] : memref<8x!tpu.dma_semaphore, #tpu.memory_space<semaphore_mem>> -> memref<1x!tpu.dma_semaphore, #tpu.memory_space<semaphore_mem>>
    %90 = tpu.memref_squeeze %89 : memref<1x!tpu.dma_semaphore, #tpu.memory_space<semaphore_mem>> -> memref<!tpu.dma_semaphore, #tpu.memory_space<semaphore_mem>>
    tpu.wait_dma2 semaphore(%90 : memref<!tpu.dma_semaphore, #tpu.memory_space<semaphore_mem>>) src(%86 : memref<2x128xf32, #tpu.memory_space<any>>) dst(%88 : memref<2x128xf32, #tpu.memory_space<vmem>>)
    %c3_i32_66 = arith.constant 3 : i32
    %c3_i32_67 = arith.constant 3 : i32
    %c0_i32_68 = arith.constant 0 : i32
    %c0_i32_69 = arith.constant 0 : i32
    %91 = tpu.memref_slice %arg2[%30, %c0_i32_68, %c0_i32_69] : memref<8x2x128xf32, #tpu.memory_space<any>> -> memref<1x2x128xf32, #tpu.memory_space<any>>
    %92 = tpu.memref_squeeze %91 : memref<1x2x128xf32, #tpu.memory_space<any>> -> memref<2x128xf32, #tpu.memory_space<any>>
    %c0_i32_70 = arith.constant 0 : i32
    %c0_i32_71 = arith.constant 0 : i32
    %93 = tpu.memref_slice %arg4[%c3_i32_66, %c0_i32_70, %c0_i32_71] : memref<8x2x128xf32, #tpu.memory_space<vmem>> -> memref<1x2x128xf32, #tpu.memory_space<vmem>>
    %94 = tpu.memref_squeeze %93 : memref<1x2x128xf32, #tpu.memory_space<vmem>> -> memref<2x128xf32, #tpu.memory_space<vmem>>
    %95 = tpu.memref_slice %arg5[%c3_i32_67] : memref<8x!tpu.dma_semaphore, #tpu.memory_space<semaphore_mem>> -> memref<1x!tpu.dma_semaphore, #tpu.memory_space<semaphore_mem>>
    %96 = tpu.memref_squeeze %95 : memref<1x!tpu.dma_semaphore, #tpu.memory_space<semaphore_mem>> -> memref<!tpu.dma_semaphore, #tpu.memory_space<semaphore_mem>>
    tpu.wait_dma2 semaphore(%96 : memref<!tpu.dma_semaphore, #tpu.memory_space<semaphore_mem>>) src(%92 : memref<2x128xf32, #tpu.memory_space<any>>) dst(%94 : memref<2x128xf32, #tpu.memory_space<vmem>>)
    %c4_i32_72 = arith.constant 4 : i32
    %c4_i32_73 = arith.constant 4 : i32
    %c0_i32_74 = arith.constant 0 : i32
    %c0_i32_75 = arith.constant 0 : i32
    %97 = tpu.memref_slice %arg2[%39, %c0_i32_74, %c0_i32_75] : memref<8x2x128xf32, #tpu.memory_space<any>> -> memref<1x2x128xf32, #tpu.memory_space<any>>
    %98 = tpu.memref_squeeze %97 : memref<1x2x128xf32, #tpu.memory_space<any>> -> memref<2x128xf32, #tpu.memory_space<any>>
    %c0_i32_76 = arith.constant 0 : i32
    %c0_i32_77 = arith.constant 0 : i32
    %99 = tpu.memref_slice %arg4[%c4_i32_72, %c0_i32_76, %c0_i32_77] : memref<8x2x128xf32, #tpu.memory_space<vmem>> -> memref<1x2x128xf32, #tpu.memory_space<vmem>>
    %100 = tpu.memref_squeeze %99 : memref<1x2x128xf32, #tpu.memory_space<vmem>> -> memref<2x128xf32, #tpu.memory_space<vmem>>
    %101 = tpu.memref_slice %arg5[%c4_i32_73] : memref<8x!tpu.dma_semaphore, #tpu.memory_space<semaphore_mem>> -> memref<1x!tpu.dma_semaphore, #tpu.memory_space<semaphore_mem>>
    %102 = tpu.memref_squeeze %101 : memref<1x!tpu.dma_semaphore, #tpu.memory_space<semaphore_mem>> -> memref<!tpu.dma_semaphore, #tpu.memory_space<semaphore_mem>>
    tpu.wait_dma2 semaphore(%102 : memref<!tpu.dma_semaphore, #tpu.memory_space<semaphore_mem>>) src(%98 : memref<2x128xf32, #tpu.memory_space<any>>) dst(%100 : memref<2x128xf32, #tpu.memory_space<vmem>>)
    %c5_i32_78 = arith.constant 5 : i32
    %c5_i32_79 = arith.constant 5 : i32
    %c0_i32_80 = arith.constant 0 : i32
    %c0_i32_81 = arith.constant 0 : i32
    %103 = tpu.memref_slice %arg2[%48, %c0_i32_80, %c0_i32_81] : memref<8x2x128xf32, #tpu.memory_space<any>> -> memref<1x2x128xf32, #tpu.memory_space<any>>
    %104 = tpu.memref_squeeze %103 : memref<1x2x128xf32, #tpu.memory_space<any>> -> memref<2x128xf32, #tpu.memory_space<any>>
    %c0_i32_82 = arith.constant 0 : i32
    %c0_i32_83 = arith.constant 0 : i32
    %105 = tpu.memref_slice %arg4[%c5_i32_78, %c0_i32_82, %c0_i32_83] : memref<8x2x128xf32, #tpu.memory_space<vmem>> -> memref<1x2x128xf32, #tpu.memory_space<vmem>>
    %106 = tpu.memref_squeeze %105 : memref<1x2x128xf32, #tpu.memory_space<vmem>> -> memref<2x128xf32, #tpu.memory_space<vmem>>
    %107 = tpu.memref_slice %arg5[%c5_i32_79] : memref<8x!tpu.dma_semaphore, #tpu.memory_space<semaphore_mem>> -> memref<1x!tpu.dma_semaphore, #tpu.memory_space<semaphore_mem>>
    %108 = tpu.memref_squeeze %107 : memref<1x!tpu.dma_semaphore, #tpu.memory_space<semaphore_mem>> -> memref<!tpu.dma_semaphore, #tpu.memory_space<semaphore_mem>>
    tpu.wait_dma2 semaphore(%108 : memref<!tpu.dma_semaphore, #tpu.memory_space<semaphore_mem>>) src(%104 : memref<2x128xf32, #tpu.memory_space<any>>) dst(%106 : memref<2x128xf32, #tpu.memory_space<vmem>>)
    %c6_i32_84 = arith.constant 6 : i32
    %c6_i32_85 = arith.constant 6 : i32
    %c0_i32_86 = arith.constant 0 : i32
    %c0_i32_87 = arith.constant 0 : i32
    %109 = tpu.memref_slice %arg2[%57, %c0_i32_86, %c0_i32_87] : memref<8x2x128xf32, #tpu.memory_space<any>> -> memref<1x2x128xf32, #tpu.memory_space<any>>
    %110 = tpu.memref_squeeze %109 : memref<1x2x128xf32, #tpu.memory_space<any>> -> memref<2x128xf32, #tpu.memory_space<any>>
    %c0_i32_88 = arith.constant 0 : i32
    %c0_i32_89 = arith.constant 0 : i32
    %111 = tpu.memref_slice %arg4[%c6_i32_84, %c0_i32_88, %c0_i32_89] : memref<8x2x128xf32, #tpu.memory_space<vmem>> -> memref<1x2x128xf32, #tpu.memory_space<vmem>>
    %112 = tpu.memref_squeeze %111 : memref<1x2x128xf32, #tpu.memory_space<vmem>> -> memref<2x128xf32, #tpu.memory_space<vmem>>
    %113 = tpu.memref_slice %arg5[%c6_i32_85] : memref<8x!tpu.dma_semaphore, #tpu.memory_space<semaphore_mem>> -> memref<1x!tpu.dma_semaphore, #tpu.memory_space<semaphore_mem>>
    %114 = tpu.memref_squeeze %113 : memref<1x!tpu.dma_semaphore, #tpu.memory_space<semaphore_mem>> -> memref<!tpu.dma_semaphore, #tpu.memory_space<semaphore_mem>>
    tpu.wait_dma2 semaphore(%114 : memref<!tpu.dma_semaphore, #tpu.memory_space<semaphore_mem>>) src(%110 : memref<2x128xf32, #tpu.memory_space<any>>) dst(%112 : memref<2x128xf32, #tpu.memory_space<vmem>>)
    %c7_i32_90 = arith.constant 7 : i32
    %c7_i32_91 = arith.constant 7 : i32
    %c0_i32_92 = arith.constant 0 : i32
    %c0_i32_93 = arith.constant 0 : i32
    %115 = tpu.memref_slice %arg2[%66, %c0_i32_92, %c0_i32_93] : memref<8x2x128xf32, #tpu.memory_space<any>> -> memref<1x2x128xf32, #tpu.memory_space<any>>
    %116 = tpu.memref_squeeze %115 : memref<1x2x128xf32, #tpu.memory_space<any>> -> memref<2x128xf32, #tpu.memory_space<any>>
    %c0_i32_94 = arith.constant 0 : i32
    %c0_i32_95 = arith.constant 0 : i32
    %117 = tpu.memref_slice %arg4[%c7_i32_90, %c0_i32_94, %c0_i32_95] : memref<8x2x128xf32, #tpu.memory_space<vmem>> -> memref<1x2x128xf32, #tpu.memory_space<vmem>>
    %118 = tpu.memref_squeeze %117 : memref<1x2x128xf32, #tpu.memory_space<vmem>> -> memref<2x128xf32, #tpu.memory_space<vmem>>
    %119 = tpu.memref_slice %arg5[%c7_i32_91] : memref<8x!tpu.dma_semaphore, #tpu.memory_space<semaphore_mem>> -> memref<1x!tpu.dma_semaphore, #tpu.memory_space<semaphore_mem>>
    %120 = tpu.memref_squeeze %119 : memref<1x!tpu.dma_semaphore, #tpu.memory_space<semaphore_mem>> -> memref<!tpu.dma_semaphore, #tpu.memory_space<semaphore_mem>>
    tpu.wait_dma2 semaphore(%120 : memref<!tpu.dma_semaphore, #tpu.memory_space<semaphore_mem>>) src(%116 : memref<2x128xf32, #tpu.memory_space<any>>) dst(%118 : memref<2x128xf32, #tpu.memory_space<vmem>>)
    %c0 = arith.constant 0 : index
    %c0_96 = arith.constant 0 : index
    %c0_97 = arith.constant 0 : index
    %121 = vector.load %arg4[%c0, %c0_96, %c0_97] : memref<8x2x128xf32, #tpu.memory_space<vmem>>, vector<8x2x128xf32>
    %c0_98 = arith.constant 0 : index
    %c0_99 = arith.constant 0 : index
    %c0_100 = arith.constant 0 : index
    %122 = vector.load %arg3[%c0_98, %c0_99, %c0_100] : memref<8x2x128xf32, #tpu.memory_space<vmem>>, vector<8x2x128xf32>
    tpu.vector_store %arg3[%c0_98, %c0_99, %c0_100], %121 {strides = array<i32>} : memref<8x2x128xf32, #tpu.memory_space<vmem>>, vector<8x2x128xf32>,
    return
  }
  func.func @transform_1(%arg0: i32, %arg1: memref<8xi32, #tpu.memory_space<smem>>) -> (i32, i32, i32) {
    %c0_i32 = arith.constant 0 : i32
    %c0_i32_0 = arith.constant 0 : i32
    %c0_i32_1 = arith.constant 0 : i32
    return %arg0, %c0_i32, %c0_i32_0 : i32, i32, i32
  }
}

</mosaic_0001>

<llo_original>
// kernel: tpu_custom_call.1
$region0: #{tpu_custom_call.1}
  #allocation0 [shape = 'u32[]', space=smem, size = 0x4, offset = 0x4, fixed_abs, tag = 'smem constant byte address 0x4 - core index']
  #allocation1 [shape = 'u32[144,128]{1,0:T(1,128)}', space=vmem, size = 0x12000, scoped, tag = 'internal scratch']
  #allocation2 [shape = 'f32[8,2,128]{2,1,0:T(2,128)}', space=vmem, size = 0x2000, scoped, tag = 'scratch operand']
  #allocation3 [shape = 's32[8]{0}', space=sflag, size = 0x20, scoped, tag = 'scratch operand']
  #allocation4 [shape = 's32[1]{0}', space=sflag, size = 0x4, scoped, tag = 'scoped memory for tpu_custom_call.1']
  #allocation5 [shape = 'u8[512]{0}', space=smem, size = 0x200, scoped, tag = 'prefetched SMEM operand 0']
  #allocation8 [shape = 's32[]', space=sflag, size = 0x4, offset = 0, fixed_abs, tag = 'sflag constant byte address 0x0 - dummy sync flag']
  #allocation9 [shape = 's32[]', space=sflag, size = 0x4, offset = 0, fixed_abs, tag = 'sflag constant byte address 0x0 - dummy sync flag']
  #allocation10 [shape = 'u32[]', space=smem, size = 0x4, offset = 0x44, fixed_abs, tag = 'smem constant byte address 0x44 - assertion arg 0']
  #allocation11 [shape = 'u32[]', space=smem, size = 0x4, offset = 0x48, fixed_abs, tag = 'smem constant byte address 0x48 - assertion arg 1']
  #allocation12 [shape = 's32[]', space=sflag, size = 0x4, offset = 0, fixed_abs, tag = 'sflag constant byte address 0x0 - dummy sync flag']
  #allocation13 [shape = 's32[]', space=sflag, size = 0x4, offset = 0, fixed_abs, tag = 'sflag constant byte address 0x0 - dummy sync flag']
  #allocation14 [shape = 's32[]', space=sflag, size = 0x4, offset = 0, fixed_abs, tag = 'sflag constant byte address 0x0 - dummy sync flag']
  #allocation15 [shape = 's32[]', space=sflag, size = 0x4, offset = 0, fixed_abs, tag = 'sflag constant byte address 0x0 - dummy sync flag']
  #allocation16 [shape = 's32[]', space=sflag, size = 0x4, offset = 0, fixed_abs, tag = 'sflag constant byte address 0x0 - dummy sync flag']
  #allocation17 [shape = 's32[]', space=sflag, size = 0x4, offset = 0, fixed_abs, tag = 'sflag constant byte address 0x0 - dummy sync flag']
  #allocation18 [shape = 's32[]', space=sflag, size = 0x4, offset = 0, fixed_abs, tag = 'sflag constant byte address 0x0 - dummy sync flag']
  #allocation19 [shape = 's32[]', space=sflag, size = 0x4, offset = 0, fixed_abs, tag = 'sflag constant byte address 0x0 - dummy sync flag']
  #allocation20 [shape = 's32[]', space=sflag, size = 0x4, offset = 0, fixed_abs, tag = 'sflag constant byte address 0x0 - dummy sync flag']
  #allocation21 [shape = 's32[]', space=sflag, size = 0x4, offset = 0, fixed_abs, tag = 'sflag constant byte address 0x0 - dummy sync flag']
  #allocation22 [shape = 's32[]', space=sflag, size = 0x4, offset = 0, fixed_abs, tag = 'sflag constant byte address 0x0 - dummy sync flag']
  #allocation23 [shape = 's32[]', space=sflag, size = 0x4, offset = 0, fixed_abs, tag = 'sflag constant byte address 0x0 - dummy sync flag']
  #allocation24 [shape = 's32[]', space=sflag, size = 0x4, offset = 0, fixed_abs, tag = 'sflag constant byte address 0x0 - dummy sync flag']
  #allocation25 [shape = 's32[]', space=sflag, size = 0x4, offset = 0, fixed_abs, tag = 'sflag constant byte address 0x0 - dummy sync flag']
  %s0 = inlined_call_operand.hbm [shape: s32[8], index: 0, kind: input, shape index: {}]
  %s1 = inlined_call_operand.hbm [shape: f32[8,2,128], index: 1, kind: input, shape index: {}]
  %s2 = inlined_call_operand.hbm [shape: f32[8,2,128], index: 2, kind: output, shape index: {}]
  %s3 = sld [smem:[#allocation0]]
  $region42: #{tpu_custom_call.1} parent=0
    _
  %s5 = ssub.s32 1, %s3
  %s6 = scalar_select 0, %s5, %s3
  %8 = dma.hbm_to_smem %s0, 16, [#allocation5], [#allocation4]
  %9 = dma.done [#allocation4], 16
  %10 = sfence
  $region1: #{tpu_custom_call.1} parent=0
    #allocation6 [shape = 'u8[8192]{0}', space=vmem, size = 0x2000, scoped, tag = 'output window, operand 0, single buffered']
    #allocation7 [shape = 's32[1]{0}', space=sflag, size = 0x4, scoped, tag = 'scoped memory for tpu_custom_call.1']
    %11 = vsyncpa [#allocation7], 0
    %s12 = smul.u32 0, 8
    %s13 = sld [smem:[#allocation5 + %s12]]
    %s14 = smul.u32 %s13, 2
    %s15 = smul.addr %s14, 16
    %s16 = scalar_lea.hbm %s1, %s15
    // Predicated region
    $region2: #{tpu_custom_call.1} parent=1 // pred_check
      _
    $region3: #{tpu_custom_call.1} parent=1 // pred_check_branch
      %18 = sbr.rel target = $region5
    $region4: #{tpu_custom_call.1} parent=1 // pred_region
      %19 = sst [smem:[#allocation10]] [#allocation9]
      %20 = sst [smem:[#allocation11]] [#allocation8]
    $region5: #{tpu_custom_call.1} parent=1 // pred_fallthru
      _
    %22 = shalt.err (0)
    %s24 = sshll.u32 [#allocation2], 4
    %s25 = int_to_ptr.vmem [resolvable:$true] %s24
    %27 = dma.hbm_to_vmem [thread:$0]  %s16, 32, %s25, [#allocation3]
    %s28 = sadd.s32 %s12, 1
    %s29 = sld [smem:[#allocation5 + %s28]]
    %s30 = smul.u32 %s29, 2
    %s31 = smul.addr %s30, 16
    %s32 = scalar_lea.hbm %s1, %s31
    %s33 = scalar_lea.vmem [#allocation2], 2
    %s34 = scalar_lea.sflag [#allocation3], 1
    // Predicated region
    $region6: #{tpu_custom_call.1} parent=1 // pred_check
      _
    $region7: #{tpu_custom_call.1} parent=1 // pred_check_branch
      %36 = sbr.rel target = $region9
    $region8: #{tpu_custom_call.1} parent=1 // pred_region
      %37 = sst [smem:[#allocation10]] [#allocation13]
      %38 = sst [smem:[#allocation11]] [#allocation12]
    $region9: #{tpu_custom_call.1} parent=1 // pred_fallthru
      _
    %40 = shalt.err (0)
    %s42 = sshll.u32 %s33, 4
    %s43 = int_to_ptr.vmem [resolvable:$true] %s42
    %45 = dma.hbm_to_vmem [thread:$0]  %s32, 32, %s43, %s34
    %s46 = sadd.s32 %s12, 2
    %s47 = sld [smem:[#allocation5 + %s46]]
    %s48 = smul.u32 %s47, 2
    %s49 = smul.addr %s48, 16
    %s50 = scalar_lea.hbm %s1, %s49
    %s51 = scalar_lea.vmem [#allocation2], 4
    %s52 = scalar_lea.sflag [#allocation3], 2
    // Predicated region
    $region10: #{tpu_custom_call.1} parent=1 // pred_check
      _
    $region11: #{tpu_custom_call.1} parent=1 // pred_check_branch
      %54 = sbr.rel target = $region13
    $region12: #{tpu_custom_call.1} parent=1 // pred_region
      %55 = sst [smem:[#allocation10]] [#allocation15]
      %56 = sst [smem:[#allocation11]] [#allocation14]
    $region13: #{tpu_custom_call.1} parent=1 // pred_fallthru
      _
    %58 = shalt.err (0)
    %s60 = sshll.u32 %s51, 4
    %s61 = int_to_ptr.vmem [resolvable:$true] %s60
    %63 = dma.hbm_to_vmem [thread:$0]  %s50, 32, %s61, %s52
    %s64 = sadd.s32 %s12, 3
    %s65 = sld [smem:[#allocation5 + %s64]]
    %s66 = smul.u32 %s65, 2
    %s67 = smul.addr %s66, 16
    %s68 = scalar_lea.hbm %s1, %s67
    %s69 = scalar_lea.vmem [#allocation2], 6
    %s70 = scalar_lea.sflag [#allocation3], 3
    // Predicated region
    $region14: #{tpu_custom_call.1} parent=1 // pred_check
      _
    $region15: #{tpu_custom_call.1} parent=1 // pred_check_branch
      %72 = sbr.rel target = $region17
    $region16: #{tpu_custom_call.1} parent=1 // pred_region
      %73 = sst [smem:[#allocation10]] [#allocation17]
      %74 = sst [smem:[#allocation11]] [#allocation16]
    $region17: #{tpu_custom_call.1} parent=1 // pred_fallthru
      _
    %76 = shalt.err (0)
    %s78 = sshll.u32 %s69, 4
    %s79 = int_to_ptr.vmem [resolvable:$true] %s78
    %81 = dma.hbm_to_vmem [thread:$0]  %s68, 32, %s79, %s70
    %s82 = sadd.s32 %s12, 4
    %s83 = sld [smem:[#allocation5 + %s82]]
    %s84 = smul.u32 %s83, 2
    %s85 = smul.addr %s84, 16
    %s86 = scalar_lea.hbm %s1, %s85
    %s87 = scalar_lea.vmem [#allocation2], 8
    %s88 = scalar_lea.sflag [#allocation3], 4
    // Predicated region
    $region18: #{tpu_custom_call.1} parent=1 // pred_check
      _
    $region19: #{tpu_custom_call.1} parent=1 // pred_check_branch
      %90 = sbr.rel target = $region21
    $region20: #{tpu_custom_call.1} parent=1 // pred_region
      %91 = sst [smem:[#allocation10]] [#allocation19]
      %92 = sst [smem:[#allocation11]] [#allocation18]
    $region21: #{tpu_custom_call.1} parent=1 // pred_fallthru
      _
    %94 = shalt.err (0)
    %s96 = sshll.u32 %s87, 4
    %s97 = int_to_ptr.vmem [resolvable:$true] %s96
    %99 = dma.hbm_to_vmem [thread:$0]  %s86, 32, %s97, %s88
    %s100 = sadd.s32 %s12, 5
    %s101 = sld [smem:[#allocation5 + %s100]]
    %s102 = smul.u32 %s101, 2
    %s103 = smul.addr %s102, 16
    %s104 = scalar_lea.hbm %s1, %s103
    %s105 = scalar_lea.vmem [#allocation2], 10
    %s106 = scalar_lea.sflag [#allocation3], 5
    // Predicated region
    $region22: #{tpu_custom_call.1} parent=1 // pred_check
      _
    $region23: #{tpu_custom_call.1} parent=1 // pred_check_branch
      %108 = sbr.rel target = $region25
    $region24: #{tpu_custom_call.1} parent=1 // pred_region
      %109 = sst [smem:[#allocation10]] [#allocation21]
      %110 = sst [smem:[#allocation11]] [#allocation20]
    $region25: #{tpu_custom_call.1} parent=1 // pred_fallthru
      _
    %112 = shalt.err (0)
    %s114 = sshll.u32 %s105, 4
    %s115 = int_to_ptr.vmem [resolvable:$true] %s114
    %117 = dma.hbm_to_vmem [thread:$0]  %s104, 32, %s115, %s106
    %s118 = sadd.s32 %s12, 6
    %s119 = sld [smem:[#allocation5 + %s118]]
    %s120 = smul.u32 %s119, 2
    %s121 = smul.addr %s120, 16
    %s122 = scalar_lea.hbm %s1, %s121
    %s123 = scalar_lea.vmem [#allocation2], 12
    %s124 = scalar_lea.sflag [#allocation3], 6
    // Predicated region
    $region26: #{tpu_custom_call.1} parent=1 // pred_check
      _
    $region27: #{tpu_custom_call.1} parent=1 // pred_check_branch
      %126 = sbr.rel target = $region29
    $region28: #{tpu_custom_call.1} parent=1 // pred_region
      %127 = sst [smem:[#allocation10]] [#allocation23]
      %128 = sst [smem:[#allocation11]] [#allocation22]
    $region29: #{tpu_custom_call.1} parent=1 // pred_fallthru
      _
    %130 = shalt.err (0)
    %s132 = sshll.u32 %s123, 4
    %s133 = int_to_ptr.vmem [resolvable:$true] %s132
    %135 = dma.hbm_to_vmem [thread:$0]  %s122, 32, %s133, %s124
    %s136 = sadd.s32 %s12, 7
    %s137 = sld [smem:[#allocation5 + %s136]]
    %s138 = smul.u32 %s137, 2
    %s139 = smul.addr %s138, 16
    %s140 = scalar_lea.hbm %s1, %s139
    %s141 = scalar_lea.vmem [#allocation2], 14
    %s142 = scalar_lea.sflag [#allocation3], 7
    // Predicated region
    $region30: #{tpu_custom_call.1} parent=1 // pred_check
      _
    $region31: #{tpu_custom_call.1} parent=1 // pred_check_branch
      %144 = sbr.rel target = $region33
    $region32: #{tpu_custom_call.1} parent=1 // pred_region
      %145 = sst [smem:[#allocation10]] [#allocation25]
      %146 = sst [smem:[#allocation11]] [#allocation24]
    $region33: #{tpu_custom_call.1} parent=1 // pred_fallthru
      _
    %148 = shalt.err (0)
    %s150 = sshll.u32 %s141, 4
    %s151 = int_to_ptr.vmem [resolvable:$true] %s150
    %153 = dma.hbm_to_vmem [thread:$0]  %s140, 32, %s151, %s142
    %s154 = smul.u32 2, 1
    %s155 = sshll.u32 %s154, 4
    %156 = dma.done [#allocation3], %s155
    %s157 = sshll.u32 %s154, 4
    %158 = dma.done %s34, %s157
    %s159 = sshll.u32 %s154, 4
    %160 = dma.done %s52, %s159
    %s161 = sshll.u32 %s154, 4
    %162 = dma.done %s70, %s161
    %s163 = sshll.u32 %s154, 4
    %164 = dma.done %s88, %s163
    %s165 = sshll.u32 %s154, 4
    %166 = dma.done %s106, %s165
    %s167 = sshll.u32 %s154, 4
    %168 = dma.done %s124, %s167
    %s169 = sshll.u32 %s154, 4
    %170 = dma.done %s142, %s169
    %v171 = vld [vmem:[#allocation2] sm:$0x3]
    %v172 = vld [vmem:[#allocation2 + $0x2] sm:$0x3]
    %v173 = vld [vmem:[#allocation2 + $0x4] sm:$0x3]
    %v174 = vld [vmem:[#allocation2 + $0x6] sm:$0x3]
    %v175 = vld [vmem:[#allocation2 + $0x8] sm:$0x3]
    %v176 = vld [vmem:[#allocation2 + $0xa] sm:$0x3]
    %v177 = vld [vmem:[#allocation2 + $0xc] sm:$0x3]
    %v178 = vld [vmem:[#allocation2 + $0xe] sm:$0x3]
    %179 = vst [vmem:[#allocation6] sm:$0x3] %v171
    %180 = vst [vmem:[#allocation6 + $0x2] sm:$0x3] %v172
    %181 = vst [vmem:[#allocation6 + $0x4] sm:$0x3] %v173
    %182 = vst [vmem:[#allocation6 + $0x6] sm:$0x3] %v174
    %183 = vst [vmem:[#allocation6 + $0x8] sm:$0x3] %v175
    %184 = vst [vmem:[#allocation6 + $0xa] sm:$0x3] %v176
    %185 = vst [vmem:[#allocation6 + $0xc] sm:$0x3] %v177
    %186 = vst [vmem:[#allocation6 + $0xe] sm:$0x3] %v178
    // Predicated region
    $region34: #{tpu_custom_call.1} parent=1 // pred_check
      _
    $region35: #{tpu_custom_call.1} parent=1 // pred_check_branch
      %188 = sbr.rel (0) target = $region37
    $region36: #{tpu_custom_call.1} parent=1 // pred_region
      %s190 = ssub.s32 256, 256
      %191 = vsyncadd [#allocation7], %s190
      %s192 = sshll.u32 [#allocation6], 4
      %s193 = int_to_ptr.vmem [resolvable:$true] %s192
      %198 = dma.vmem_to_hbm [thread:$0]  %s193, 256, %s2, [#allocation7], 32, 32, 2
    $region37: #{tpu_custom_call.1} parent=1 // pred_fallthru
      _
    // Predicated region
    $region38: #{tpu_custom_call.1} parent=1 // pred_check
      _
    $region39: #{tpu_custom_call.1} parent=1 // pred_check_branch
      %200 = sbr.rel (0) target = $region41
    $region40: #{tpu_custom_call.1} parent=1 // pred_region
      %201 = dma.done [#allocation7], 256
    $region41: #{tpu_custom_call.1} parent=1 // pred_fallthru
      _
    %202 = vsyncpa [#allocation7], 1
  %203 = vsyncmov [#allocation3]
  %s204 = vpop.sfrf %203
  %p205 = scmp.eq.s32.totalorder %s204, 0
  %p206 = pneg %p205
  %208 = shalt.err (%p206)
  %s209 = scalar_lea.sflag [#allocation3], 1
  %210 = vsyncmov %s209
  %s211 = vpop.sfrf %210
  %p212 = scmp.eq.s32.totalorder %s211, 0
  %p213 = pneg %p212
  %215 = shalt.err (%p213)
  %s216 = scalar_lea.sflag [#allocation3], 2
  %217 = vsyncmov %s216
  %s218 = vpop.sfrf %217
  %p219 = scmp.eq.s32.totalorder %s218, 0
  %p220 = pneg %p219
  %222 = shalt.err (%p220)
  %s223 = scalar_lea.sflag [#allocation3], 3
  %224 = vsyncmov %s223
  %s225 = vpop.sfrf %224
  %p226 = scmp.eq.s32.totalorder %s225, 0
  %p227 = pneg %p226
  %229 = shalt.err (%p227)
  %s230 = scalar_lea.sflag [#allocation3], 4
  %231 = vsyncmov %s230
  %s232 = vpop.sfrf %231
  %p233 = scmp.eq.s32.totalorder %s232, 0
  %p234 = pneg %p233
  %236 = shalt.err (%p234)
  %s237 = scalar_lea.sflag [#allocation3], 5
  %238 = vsyncmov %s237
  %s239 = vpop.sfrf %238
  %p240 = scmp.eq.s32.totalorder %s239, 0
  %p241 = pneg %p240
  %243 = shalt.err (%p241)
  %s244 = scalar_lea.sflag [#allocation3], 6
  %245 = vsyncmov %s244
  %s246 = vpop.sfrf %245
  %p247 = scmp.eq.s32.totalorder %s246, 0
  %p248 = pneg %p247
  %250 = shalt.err (%p248)
  %s251 = scalar_lea.sflag [#allocation3], 7
  %252 = vsyncmov %s251
  %s253 = vpop.sfrf %252
  %p254 = scmp.eq.s32.totalorder %s253, 0
  %p255 = pneg %p254
  %257 = shalt.err (%p255)

</llo_original>
